<compile_context>
chip_gen: v6e
topology: v6e:2x2x1
jax: 0.10.0
libtpu: 0.0.40
codegen_flags: <defaults>
</compile_context>

<pallas_src>
import jax
import jax.numpy as jnp
from jax.experimental import pallas as pl
from jax.experimental.pallas import tpu as pltpu


def _critic_kernel(state_ref, action_ref, w1s_ref, w1a_ref, b1_ref,
                   w2_ref, b2_ref, w3_ref, b3_ref, o_ref):
    # Layer 1: fused concat via split weights: [s, a] @ W1 == s@W1s + a@W1a.
    h1 = jnp.dot(state_ref[...], w1s_ref[...], preferred_element_type=jnp.float32)
    h1 = h1 + jnp.dot(action_ref[...], w1a_ref[...],
                      preferred_element_type=jnp.float32)
    h1 = jnp.maximum(h1 + b1_ref[...], 0.0)

    # Layer 2: Linear(128 -> 128) + ReLU (MXU, f32 accumulate).
    h2 = jnp.dot(h1, w2_ref[...], preferred_element_type=jnp.float32) + b2_ref[...]
    h2 = jnp.maximum(h2, 0.0)

    # Layer 3: Linear(128 -> 1) as VPU multiply + lane reduction; bias from SMEM.
    out = jnp.sum(h2 * w3_ref[...], axis=-1, keepdims=True) + b3_ref[0]
    o_ref[...] = out.astype(o_ref.dtype)


def critic_forward(state, action, params, *, block_b=512):
    """state: (B, S), action: (B, A) -> (B, 1) float32."""
    w1_s, w1_a, b1, w2, b2, w3_row, b3 = params
    B, S = state.shape
    A = action.shape[1]

    # Batch tile: whole batch if it fits a single block, else 512-row tiles
    # (512 is a multiple of 8 and keeps double-buffered activations tiny).
    tb = B if B <= block_b else block_b
    grid = (pl.cdiv(B, tb),)

    # Weights / bias rows stay resident in VMEM across all batch tiles.
    resident = lambda a: pl.BlockSpec(a.shape, lambda i: (0,) * a.ndim)

    return pl.pallas_call(
        _critic_kernel,
        out_shape=jax.ShapeDtypeStruct((B, 1), jnp.float32),
        grid=grid,
        in_specs=[
            pl.BlockSpec((tb, S), lambda i: (i, 0)),        # state tile
            pl.BlockSpec((tb, A), lambda i: (i, 0)),        # action tile
            resident(w1_s), resident(w1_a), resident(b1),
            resident(w2), resident(b2), resident(w3_row),
            pl.BlockSpec(memory_space=pltpu.MemorySpace.SMEM),  # b3 scalar
        ],
        out_specs=pl.BlockSpec((tb, 1), lambda i: (i, 0)),
        compiler_params=pltpu.CompilerParams(
            dimension_semantics=("parallel",)),
    )(state, action, w1_s, w1_a, b1, w2, b2, w3_row, b3)


def init_critic_params(key, state_space, action_space, hidden=128):
    """Deterministic init mimicking nn.Linear's U(-1/sqrt(fan_in), 1/sqrt(fan_in)).

    Weights stored transposed ((in, out)); W1 pre-split into state/action parts;
    W3 stored as a (1, hidden) row; b3 as a (1,) scalar for SMEM.
    """
    d_in = state_space + action_space
    ks = jax.random.split(key, 6)

    def lin(kw, kb, fin, fout):
        bound = 1.0 / jnp.sqrt(fin)
        w = jax.random.uniform(kw, (fin, fout), jnp.float32, -bound, bound)
        b = jax.random.uniform(kb, (1, fout), jnp.float32, -bound, bound)
        return w, b

    w1, b1 = lin(ks[0], ks[1], d_in, hidden)       # (S+A, 128), fan_in = S+A
    w2, b2 = lin(ks[2], ks[3], hidden, hidden)     # (128, 128)
    w3, b3 = lin(ks[4], ks[5], hidden, 1)          # (128, 1)

    w1_s = w1[:state_space]                        # (S, 128)
    w1_a = w1[state_space:]                        # (A, 128)
    w3_row = w3.T                                  # (1, 128)
    b3_scalar = b3.reshape((1,))                   # (1,)  -> SMEM
    return (w1_s, w1_a, b1, w2, b2, w3_row, b3_scalar)


if __name__ == "__main__":
    key = jax.random.PRNGKey(0)
    k_state, k_action, k_params = jax.random.split(key, 3)

    batch, state_space, action_space = 8, 16, 8
    state = jax.random.normal(k_state, (batch, state_space), jnp.float32)
    action = jax.random.normal(k_action, (batch, action_space), jnp.float32)
    params = init_critic_params(k_params, state_space, action_space)

    out = critic_forward(state, action, params)
    jax.block_until_ready(out)

    # Sanity check against a plain-JAX reference of the same math.
    w1_s, w1_a, b1, w2, b2, w3_row, b3 = params
    x = jnp.concatenate([state, action], axis=1)
    w1_full = jnp.concatenate([w1_s, w1_a], axis=0)
    ref = jnp.maximum(x @ w1_full + b1, 0.0)
    ref = jnp.maximum(ref @ w2 + b2, 0.0)
    ref = ref @ w3_row.T + b3
    assert out.shape == (batch, 1)
    assert jnp.allclose(out, ref, atol=1e-5, rtol=1e-5)

    print("KERNEL_OK")
</pallas_src>

<mosaic_0001>
module attributes {stable_mosaic.version = 11 : i64} {
  func.func @_critic_kernel(%arg0: i32, %arg1: memref<8x16xf32, #tpu.memory_space<vmem>>, %arg2: memref<8x8xf32, #tpu.memory_space<vmem>>, %arg3: memref<16x128xf32, #tpu.memory_space<vmem>>, %arg4: memref<8x128xf32, #tpu.memory_space<vmem>>, %arg5: memref<1x128xf32, #tpu.memory_space<vmem>>, %arg6: memref<128x128xf32, #tpu.memory_space<vmem>>, %arg7: memref<1x128xf32, #tpu.memory_space<vmem>>, %arg8: memref<1x128xf32, #tpu.memory_space<vmem>>, %arg9: memref<1xf32, #tpu.memory_space<smem>>, %arg10: memref<8x1xf32, #tpu.memory_space<vmem>>) attributes {dimension_semantics = [#tpu.dimension_semantics<parallel>], iteration_bounds = array<i64: 1>, scalar_prefetch = 0 : i64, scratch_operands = 0 : i64, tpu.core_type = #tpu.core_type<tc>, window_params = [{transform_indices = @transform_0, window_bounds = array<i64: 8, 16>}, {transform_indices = @transform_1, window_bounds = array<i64: 8, 8>}, {pipeline_mode = #tpu.pipeline_mode<synchronous>, transform_indices = @transform_2, window_bounds = array<i64: 16, 128>}, {pipeline_mode = #tpu.pipeline_mode<synchronous>, transform_indices = @transform_3, window_bounds = array<i64: 8, 128>}, {pipeline_mode = #tpu.pipeline_mode<synchronous>, transform_indices = @transform_4, window_bounds = array<i64: 1, 128>}, {pipeline_mode = #tpu.pipeline_mode<synchronous>, transform_indices = @transform_5, window_bounds = array<i64: 128, 128>}, {pipeline_mode = #tpu.pipeline_mode<synchronous>, transform_indices = @transform_6, window_bounds = array<i64: 1, 128>}, {pipeline_mode = #tpu.pipeline_mode<synchronous>, transform_indices = @transform_7, window_bounds = array<i64: 1, 128>}, {transform_indices = @transform_8, window_bounds = array<i64: 1>}, {transform_indices = @transform_9, window_bounds = array<i64: 8, 1>}]} {
    %c0 = arith.constant 0 : index
    %c0_0 = arith.constant 0 : index
    %0 = vector.load %arg1[%c0, %c0_0] : memref<8x16xf32, #tpu.memory_space<vmem>>, vector<8x16xf32>
    %c0_1 = arith.constant 0 : index
    %c0_2 = arith.constant 0 : index
    %1 = vector.load %arg3[%c0_1, %c0_2] : memref<16x128xf32, #tpu.memory_space<vmem>>, vector<16x128xf32>
    %cst = arith.constant dense<0.000000e+00> : vector<8x128xf32>
    %2 = tpu.matmul %0, %1, %cst {dimension_numbers = #tpu.dot_dimension_numbers<[1], [0], [0], [1], [0, 0, 1, 1], [], []>} : vector<8x16xf32>, vector<16x128xf32>, vector<8x128xf32> -> vector<8x128xf32>
    %c0_3 = arith.constant 0 : index
    %c0_4 = arith.constant 0 : index
    %3 = vector.load %arg2[%c0_3, %c0_4] : memref<8x8xf32, #tpu.memory_space<vmem>>, vector<8x8xf32>
    %c0_5 = arith.constant 0 : index
    %c0_6 = arith.constant 0 : index
    %4 = vector.load %arg4[%c0_5, %c0_6] : memref<8x128xf32, #tpu.memory_space<vmem>>, vector<8x128xf32>
    %cst_7 = arith.constant dense<0.000000e+00> : vector<8x128xf32>
    %5 = tpu.matmul %3, %4, %cst_7 {dimension_numbers = #tpu.dot_dimension_numbers<[1], [0], [0], [1], [0, 0, 1, 1], [], []>} : vector<8x8xf32>, vector<8x128xf32>, vector<8x128xf32> -> vector<8x128xf32>
    %6 = arith.addf %2, %5 : vector<8x128xf32>
    %c0_8 = arith.constant 0 : index
    %c0_9 = arith.constant 0 : index
    %7 = vector.load %arg5[%c0_8, %c0_9] : memref<1x128xf32, #tpu.memory_space<vmem>>, vector<1x128xf32>
    %8 = vector.broadcast %7 : vector<1x128xf32> to vector<8x128xf32>
    %9 = arith.addf %6, %8 : vector<8x128xf32>
    %cst_10 = arith.constant 0.000000e+00 : f32
    %10 = vector.broadcast %cst_10 : f32 to vector<8x128xf32>
    %11 = arith.maximumf %9, %10 : vector<8x128xf32>
    %c0_11 = arith.constant 0 : index
    %c0_12 = arith.constant 0 : index
    %12 = vector.load %arg6[%c0_11, %c0_12] : memref<128x128xf32, #tpu.memory_space<vmem>>, vector<128x128xf32>
    %cst_13 = arith.constant dense<0.000000e+00> : vector<8x128xf32>
    %13 = tpu.matmul %11, %12, %cst_13 {dimension_numbers = #tpu.dot_dimension_numbers<[1], [0], [0], [1], [0, 0, 1, 1], [], []>} : vector<8x128xf32>, vector<128x128xf32>, vector<8x128xf32> -> vector<8x128xf32>
    %c0_14 = arith.constant 0 : index
    %c0_15 = arith.constant 0 : index
    %14 = vector.load %arg7[%c0_14, %c0_15] : memref<1x128xf32, #tpu.memory_space<vmem>>, vector<1x128xf32>
    %15 = vector.broadcast %14 : vector<1x128xf32> to vector<8x128xf32>
    %16 = arith.addf %13, %15 : vector<8x128xf32>
    %cst_16 = arith.constant 0.000000e+00 : f32
    %17 = vector.broadcast %cst_16 : f32 to vector<8x128xf32>
    %18 = arith.maximumf %16, %17 : vector<8x128xf32>
    %c0_17 = arith.constant 0 : index
    %c0_18 = arith.constant 0 : index
    %19 = vector.load %arg8[%c0_17, %c0_18] : memref<1x128xf32, #tpu.memory_space<vmem>>, vector<1x128xf32>
    %20 = vector.broadcast %19 : vector<1x128xf32> to vector<8x128xf32>
    %21 = arith.mulf %18, %20 : vector<8x128xf32>
    %cst_19 = arith.constant dense<0.000000e+00> : vector<8xf32>
    %22 = vector.multi_reduction <add>, %21, %cst_19 [1] : vector<8x128xf32> to vector<8xf32>
    %23 = vector.shape_cast %22 : vector<8xf32> to vector<8x1xf32>
    %c0_20 = arith.constant 0 : index
    %24 = memref.load %arg9[%c0_20] : memref<1xf32, #tpu.memory_space<smem>>
    %25 = vector.broadcast %24 : f32 to vector<8x1xf32>
    %26 = arith.addf %23, %25 : vector<8x1xf32>
    %c0_21 = arith.constant 0 : index
    %c0_22 = arith.constant 0 : index
    %27 = vector.load %arg10[%c0_21, %c0_22] : memref<8x1xf32, #tpu.memory_space<vmem>>, vector<8x1xf32>
    tpu.vector_store %arg10[%c0_21, %c0_22], %26 {strides = array<i32>} : memref<8x1xf32, #tpu.memory_space<vmem>>, vector<8x1xf32>,
    return
  }
  func.func @transform_0(%arg0: i32) -> (i32, i32) {
    %c0_i32 = arith.constant 0 : i32
    %c0_i32_0 = arith.constant 0 : i32
    return %arg0, %c0_i32 : i32, i32
  }
  func.func @transform_1(%arg0: i32) -> (i32, i32) {
    %c0_i32 = arith.constant 0 : i32
    %c0_i32_0 = arith.constant 0 : i32
    return %arg0, %c0_i32 : i32, i32
  }
  func.func @transform_2(%arg0: i32) -> (i32, i32) {
    %c0_i32 = arith.constant 0 : i32
    %c0_i32_0 = arith.constant 0 : i32
    %c0_i32_1 = arith.constant 0 : i32
    return %c0_i32, %c0_i32_0 : i32, i32
  }
  func.func @transform_3(%arg0: i32) -> (i32, i32) {
    %c0_i32 = arith.constant 0 : i32
    %c0_i32_0 = arith.constant 0 : i32
    %c0_i32_1 = arith.constant 0 : i32
    return %c0_i32, %c0_i32_0 : i32, i32
  }
  func.func @transform_4(%arg0: i32) -> (i32, i32) {
    %c0_i32 = arith.constant 0 : i32
    %c0_i32_0 = arith.constant 0 : i32
    %c0_i32_1 = arith.constant 0 : i32
    return %c0_i32, %c0_i32_0 : i32, i32
  }
  func.func @transform_5(%arg0: i32) -> (i32, i32) {
    %c0_i32 = arith.constant 0 : i32
    %c0_i32_0 = arith.constant 0 : i32
    %c0_i32_1 = arith.constant 0 : i32
    return %c0_i32, %c0_i32_0 : i32, i32
  }
  func.func @transform_6(%arg0: i32) -> (i32, i32) {
    %c0_i32 = arith.constant 0 : i32
    %c0_i32_0 = arith.constant 0 : i32
    %c0_i32_1 = arith.constant 0 : i32
    return %c0_i32, %c0_i32_0 : i32, i32
  }
  func.func @transform_7(%arg0: i32) -> (i32, i32) {
    %c0_i32 = arith.constant 0 : i32
    %c0_i32_0 = arith.constant 0 : i32
    %c0_i32_1 = arith.constant 0 : i32
    return %c0_i32, %c0_i32_0 : i32, i32
  }
  func.func @transform_8(%arg0: i32) -> i32 {
    %c0_i32 = arith.constant 0 : i32
    %c0_i32_0 = arith.constant 0 : i32
    return %c0_i32 : i32
  }
  func.func @transform_9(%arg0: i32) -> (i32, i32) {
    %c0_i32 = arith.constant 0 : i32
    %c0_i32_0 = arith.constant 0 : i32
    return %arg0, %c0_i32 : i32, i32
  }
}

</mosaic_0001>

<llo_original>
// kernel: tpu_custom_call.1
$region0: #{tpu_custom_call.1}
  #allocation0 [shape = 'u32[]', space=smem, size = 0x4, offset = 0x4, fixed_abs, tag = 'smem constant byte address 0x4 - core index']
  #allocation1 [shape = 'u32[144,128]{1,0:T(1,128)}', space=vmem, size = 0x12000, scoped, tag = 'internal scratch']
  #allocation2 [shape = 'f32[1]{0:T(128)S(6)}', space=smem, size = 0x200, scoped, tag = 'scoped memory for tpu_custom_call.1']
  %s0 = inlined_call_operand.hbm [shape: f32[8,16], index: 0, kind: input, shape index: {}]
  %s1 = inlined_call_operand.hbm [shape: f32[8,8], index: 1, kind: input, shape index: {}]
  %s2 = inlined_call_operand.hbm [shape: f32[16,128], index: 2, kind: input, shape index: {}]
  %s3 = inlined_call_operand.hbm [shape: f32[8,128], index: 3, kind: input, shape index: {}]
  %s4 = inlined_call_operand.vmem [shape: f32[1,128], index: 4, kind: input, shape index: {}]
  %s5 = inlined_call_operand.hbm [shape: f32[128,128], index: 5, kind: input, shape index: {}]
  %s6 = inlined_call_operand.vmem [shape: f32[1,128], index: 6, kind: input, shape index: {}]
  %s7 = inlined_call_operand.vmem [shape: f32[1,128], index: 7, kind: input, shape index: {}]
  %s8 = inlined_call_operand.<no memory space> [shape: f32[1], index: 8, kind: input, shape index: {}]
  %s9 = inlined_call_operand.vmem [shape: f32[8,1], index: 9, kind: output, shape index: {}]
  %s10 = sld [smem:[#allocation0]]
  $region66: #{tpu_custom_call.1} parent=0
    _
  %s12 = ssub.s32 1, %s10
  %s13 = scalar_select 0, %s12, %s10
  %14 = sst [smem:[#allocation2]] %s8
  $region1: #{tpu_custom_call.1} parent=0
    #allocation3 [shape = 'u8[4096]{0}', space=vmem, size = 0x1000, scoped, tag = 'input window, operand 0, single buffered']
    #allocation4 [shape = 's32[1]{0}', space=sflag, size = 0x4, scoped, tag = 'scoped memory for tpu_custom_call.1']
    #allocation5 [shape = 'u8[4096]{0}', space=vmem, size = 0x1000, scoped, tag = 'input window, operand 1, single buffered']
    #allocation6 [shape = 's32[1]{0}', space=sflag, size = 0x4, scoped, tag = 'scoped memory for tpu_custom_call.1']
    #allocation7 [shape = 'u8[8192]{0}', space=vmem, size = 0x2000, scoped, tag = 'input window, operand 2, single buffered']
    #allocation8 [shape = 'u8[4096]{0}', space=vmem, size = 0x1000, scoped, tag = 'input window, operand 3, single buffered']
    #allocation9 [shape = 's32[1]{0}', space=sflag, size = 0x4, scoped, tag = 'scoped memory for tpu_custom_call.1']
    #allocation10 [shape = 'u8[65536]{0}', space=vmem, size = 0x10000, scoped, tag = 'input window, operand 5, single buffered']
    %15 = vsyncpa [#allocation4], 0
    %16 = vsyncpa [#allocation6], 0
    %17 = vsyncpa [#allocation9], 0
    // Predicated region
    $region2: #{tpu_custom_call.1} parent=1 // pred_check
      _
    $region3: #{tpu_custom_call.1} parent=1 // pred_check_branch
      %19 = sbr.rel (0) target = $region5
    $region4: #{tpu_custom_call.1} parent=1 // pred_region
      %s21 = ssub.s32 128, 128
      %22 = vsyncadd [#allocation4], %s21
      %s24 = sshll.u32 [#allocation3], 4
      %s25 = int_to_ptr.vmem [resolvable:$true] %s24
      %27 = dma.hbm_to_vmem [thread:$0]  %s0, 128, %s25, [#allocation4]
    $region5: #{tpu_custom_call.1} parent=1 // pred_fallthru
      _
    // Predicated region
    $region6: #{tpu_custom_call.1} parent=1 // pred_check
      _
    $region7: #{tpu_custom_call.1} parent=1 // pred_check_branch
      %29 = sbr.rel (0) target = $region9
    $region8: #{tpu_custom_call.1} parent=1 // pred_region
      %s31 = ssub.s32 128, 128
      %32 = vsyncadd [#allocation6], %s31
      %s34 = sshll.u32 [#allocation5], 4
      %s35 = int_to_ptr.vmem [resolvable:$true] %s34
      %37 = dma.hbm_to_vmem [thread:$0]  %s1, 128, %s35, [#allocation6]
    $region9: #{tpu_custom_call.1} parent=1 // pred_fallthru
      _
    // Predicated region
    $region10: #{tpu_custom_call.1} parent=1 // pred_check
      _
    $region11: #{tpu_custom_call.1} parent=1 // pred_check_branch
      %39 = sbr.rel (0) target = $region13
    $region12: #{tpu_custom_call.1} parent=1 // pred_region
      %s41 = ssub.s32 256, 256
      %42 = vsyncadd [#allocation6], %s41
      %s43 = sshll.u32 [#allocation7], 4
      %s44 = int_to_ptr.vmem [resolvable:$true] %s43
      %49 = dma.hbm_to_vmem [thread:$0]  %s2, 256, %s44, [#allocation6], 128, 128, 8
    $region13: #{tpu_custom_call.1} parent=1 // pred_fallthru
      _
    // Predicated region
    $region14: #{tpu_custom_call.1} parent=1 // pred_check
      _
    $region15: #{tpu_custom_call.1} parent=1 // pred_check_branch
      %51 = sbr.rel (0) target = $region17
    $region16: #{tpu_custom_call.1} parent=1 // pred_region
      %s53 = ssub.s32 128, 128
      %54 = vsyncadd [#allocation9], %s53
      %s56 = sshll.u32 [#allocation8], 4
      %s57 = int_to_ptr.vmem [resolvable:$true] %s56
      %59 = dma.hbm_to_vmem [thread:$0]  %s3, 128, %s57, [#allocation9]
    $region17: #{tpu_custom_call.1} parent=1 // pred_fallthru
      _
    // Predicated region
    $region18: #{tpu_custom_call.1} parent=1 // pred_check
      _
    $region19: #{tpu_custom_call.1} parent=1 // pred_check_branch
      %61 = sbr.rel (0) target = $region21
    $region20: #{tpu_custom_call.1} parent=1 // pred_region
      _
    $region21: #{tpu_custom_call.1} parent=1 // pred_fallthru
      _
    // Predicated region
    $region22: #{tpu_custom_call.1} parent=1 // pred_check
      _
    $region23: #{tpu_custom_call.1} parent=1 // pred_check_branch
      %63 = sbr.rel (0) target = $region25
    $region24: #{tpu_custom_call.1} parent=1 // pred_region
      %s65 = ssub.s32 2048, 2048
      %66 = vsyncadd [#allocation9], %s65
      %s67 = sshll.u32 [#allocation10], 4
      %s68 = int_to_ptr.vmem [resolvable:$true] %s67
      %73 = dma.hbm_to_vmem [thread:$0]  %s5, 2048, %s68, [#allocation9], 128, 128, 8
    $region25: #{tpu_custom_call.1} parent=1 // pred_fallthru
      _
    // Predicated region
    $region26: #{tpu_custom_call.1} parent=1 // pred_check
      _
    $region27: #{tpu_custom_call.1} parent=1 // pred_check_branch
      %75 = sbr.rel (0) target = $region29
    $region28: #{tpu_custom_call.1} parent=1 // pred_region
      _
    $region29: #{tpu_custom_call.1} parent=1 // pred_fallthru
      _
    // Predicated region
    $region30: #{tpu_custom_call.1} parent=1 // pred_check
      _
    $region31: #{tpu_custom_call.1} parent=1 // pred_check_branch
      %77 = sbr.rel (0) target = $region33
    $region32: #{tpu_custom_call.1} parent=1 // pred_region
      _
    $region33: #{tpu_custom_call.1} parent=1 // pred_fallthru
      _
    // Predicated region
    $region34: #{tpu_custom_call.1} parent=1 // pred_check
      _
    $region35: #{tpu_custom_call.1} parent=1 // pred_check_branch
      %79 = sbr.rel (0) target = $region37
    $region36: #{tpu_custom_call.1} parent=1 // pred_region
      _
    $region37: #{tpu_custom_call.1} parent=1 // pred_fallthru
      _
    // Predicated region
    $region38: #{tpu_custom_call.1} parent=1 // pred_check
      _
    $region39: #{tpu_custom_call.1} parent=1 // pred_check_branch
      %81 = sbr.rel (0) target = $region41
    $region40: #{tpu_custom_call.1} parent=1 // pred_region
      %82 = dma.done [#allocation4], 128
    $region41: #{tpu_custom_call.1} parent=1 // pred_fallthru
      _
    // Predicated region
    $region42: #{tpu_custom_call.1} parent=1 // pred_check
      _
    $region43: #{tpu_custom_call.1} parent=1 // pred_check_branch
      %84 = sbr.rel (0) target = $region45
    $region44: #{tpu_custom_call.1} parent=1 // pred_region
      %85 = dma.done [#allocation6], 128
    $region45: #{tpu_custom_call.1} parent=1 // pred_fallthru
      _
    // Predicated region
    $region46: #{tpu_custom_call.1} parent=1 // pred_check
      _
    $region47: #{tpu_custom_call.1} parent=1 // pred_check_branch
      %87 = sbr.rel (0) target = $region49
    $region48: #{tpu_custom_call.1} parent=1 // pred_region
      %88 = dma.done [#allocation6], 256
    $region49: #{tpu_custom_call.1} parent=1 // pred_fallthru
      _
    // Predicated region
    $region50: #{tpu_custom_call.1} parent=1 // pred_check
      _
    $region51: #{tpu_custom_call.1} parent=1 // pred_check_branch
      %90 = sbr.rel (0) target = $region53
    $region52: #{tpu_custom_call.1} parent=1 // pred_region
      %91 = dma.done [#allocation9], 128
    $region53: #{tpu_custom_call.1} parent=1 // pred_fallthru
      _
    // Predicated region
    $region54: #{tpu_custom_call.1} parent=1 // pred_check
      _
    $region55: #{tpu_custom_call.1} parent=1 // pred_check_branch
      %93 = sbr.rel (0) target = $region57
    $region56: #{tpu_custom_call.1} parent=1 // pred_region
      %94 = dma.done [#allocation9], 2048
    $region57: #{tpu_custom_call.1} parent=1 // pred_fallthru
      _
    %v95 = vld [vmem:[#allocation3] sm:$0xff]
    %v96 = vld [vmem:[#allocation7] sm:$0xff]
    %v97 = vld [vmem:[#allocation7 + $0x8] sm:$0xff]
    %v98 = vld [vmem:[#allocation5] sm:$0xff]
    %v99 = vld [vmem:[#allocation8] sm:$0xff]
    %vm100 = vcmask 64512
    %v102 = vsel %vm100, %v98, 0
    %104 = vmatprep.subr.mxu0 0.0
    %105 = vmatpush1.msra.mxu0 0.0
    %106 = vmatprep.subr.mxu0 0.0
    %107 = vmatpush1.msra.mxu0 0.0
    %108 = vmatprep.subr.mxu0 0.0
    %109 = vmatpush1.msra.mxu0 0.0
    %110 = vmatprep.subr.mxu0 0.0
    %111 = vmatpush1.msra.mxu0 0.0
    %112 = vmatprep.subr.mxu0 0.0
    %113 = vmatpush1.msra.mxu0 0.0
    %114 = vmatprep.subr.mxu0 0.0
    %115 = vmatpush1.msra.mxu0 0.0
    %116 = vmatprep.subr.mxu0 0.0
    %117 = vmatpush1.msra.mxu0 0.0
    %118 = vmatprep.subr.mxu0 0.0
    %119 = vmatpush1.msra.mxu0 0.0
    %120 = vmatprep.subr.mxu0 0.0
    %121 = vmatpush1.msra.mxu0 0.0
    %122 = vmatprep.subr.mxu0 0.0
    %123 = vmatpush1.msra.mxu0 0.0
    %124 = vmatprep.subr.mxu0 0.0
    %125 = vmatpush1.msra.mxu0 0.0
    %126 = vmatprep.subr.mxu0 0.0
    %127 = vmatpush1.msra.mxu0 0.0
    %128 = vmatprep.subr.mxu0 0.0
    %129 = vmatpush1.msra.mxu0 0.0
    %130 = vmatprep.subr.mxu0 0.0
    %131 = vmatpush1.msra.mxu0 0.0
    %132 = vmatprep.subr.mxu0 0.0
    %133 = vmatpush1.msra.mxu0 0.0
    %134 = vmatprep.subr.mxu0 0.0
    %135 = vmatpush1.msra.mxu0 %v99
    %136 = vmatprep.subr.mxu0 0.0
    %137 = vmatpush2.msra.mxu0 0.0
    %138 = vmatprep.subr.mxu0 0.0
    %139 = vmatpush2.msra.mxu0 0.0
    %140 = vmatprep.subr.mxu0 0.0
    %141 = vmatpush2.msra.mxu0 0.0
    %142 = vmatprep.subr.mxu0 0.0
    %143 = vmatpush2.msra.mxu0 0.0
    %144 = vmatprep.subr.mxu0 0.0
    %145 = vmatpush2.msra.mxu0 0.0
    %146 = vmatprep.subr.mxu0 0.0
    %147 = vmatpush2.msra.mxu0 0.0
    %148 = vmatprep.subr.mxu0 0.0
    %149 = vmatpush2.msra.mxu0 0.0
    %150 = vmatprep.subr.mxu0 0.0
    %151 = vmatpush2.msra.mxu0 0.0
    %152 = vmatprep.subr.mxu0 0.0
    %153 = vmatpush2.msra.mxu0 0.0
    %154 = vmatprep.subr.mxu0 0.0
    %155 = vmatpush2.msra.mxu0 0.0
    %156 = vmatprep.subr.mxu0 0.0
    %157 = vmatpush2.msra.mxu0 0.0
    %158 = vmatprep.subr.mxu0 0.0
    %159 = vmatpush2.msra.mxu0 0.0
    %160 = vmatprep.subr.mxu0 0.0
    %161 = vmatpush2.msra.mxu0 0.0
    %162 = vmatprep.subr.mxu0 0.0
    %163 = vmatpush2.msra.mxu0 0.0
    %164 = vmatprep.subr.mxu0 0.0
    %165 = vmatpush2.msra.mxu0 0.0
    %166 = vmatprep.subr.mxu0 0.0
    %167 = vmatpush2.msra.mxu0 0.0
    %168 = vmatprep.mubr.f32.mxu0 0.0
    %169 = vmatmul.mubr.f32.gmra.mxu0 %v102
    %v170 = vpop.f32.mrf.mxu0
    %v171 = vadd.f32 0.0, %v170
    %v172 = vpop.f32.mrf.mxu0
    %173 = vdwg.mxu0
    %vm174 = vcmask 130048
    %v176 = vsel %vm174, %v95, 0
    %178 = vmatprep.subr.mxu0 0.0
    %179 = vmatpush1.msra.mxu0 0.0
    %180 = vmatprep.subr.mxu0 0.0
    %181 = vmatpush1.msra.mxu0 0.0
    %182 = vmatprep.subr.mxu0 0.0
    %183 = vmatpush1.msra.mxu0 0.0
    %184 = vmatprep.subr.mxu0 0.0
    %185 = vmatpush1.msra.mxu0 0.0
    %186 = vmatprep.subr.mxu0 0.0
    %187 = vmatpush1.msra.mxu0 0.0
    %188 = vmatprep.subr.mxu0 0.0
    %189 = vmatpush1.msra.mxu0 0.0
    %190 = vmatprep.subr.mxu0 0.0
    %191 = vmatpush1.msra.mxu0 0.0
    %192 = vmatprep.subr.mxu0 0.0
    %193 = vmatpush1.msra.mxu0 0.0
    %194 = vmatprep.subr.mxu0 0.0
    %195 = vmatpush1.msra.mxu0 0.0
    %196 = vmatprep.subr.mxu0 0.0
    %197 = vmatpush1.msra.mxu0 0.0
    %198 = vmatprep.subr.mxu0 0.0
    %199 = vmatpush1.msra.mxu0 0.0
    %200 = vmatprep.subr.mxu0 0.0
    %201 = vmatpush1.msra.mxu0 0.0
    %202 = vmatprep.subr.mxu0 0.0
    %203 = vmatpush1.msra.mxu0 0.0
    %204 = vmatprep.subr.mxu0 0.0
    %205 = vmatpush1.msra.mxu0 0.0
    %206 = vmatprep.subr.mxu0 0.0
    %207 = vmatpush1.msra.mxu0 %v97
    %208 = vmatprep.subr.mxu0 0.0
    %209 = vmatpush1.msra.mxu0 %v96
    %210 = vmatprep.subr.mxu0 0.0
    %211 = vmatpush2.msra.mxu0 0.0
    %212 = vmatprep.subr.mxu0 0.0
    %213 = vmatpush2.msra.mxu0 0.0
    %214 = vmatprep.subr.mxu0 0.0
    %215 = vmatpush2.msra.mxu0 0.0
    %216 = vmatprep.subr.mxu0 0.0
    %217 = vmatpush2.msra.mxu0 0.0
    %218 = vmatprep.subr.mxu0 0.0
    %219 = vmatpush2.msra.mxu0 0.0
    %220 = vmatprep.subr.mxu0 0.0
    %221 = vmatpush2.msra.mxu0 0.0
    %222 = vmatprep.subr.mxu0 0.0
    %223 = vmatpush2.msra.mxu0 0.0
    %224 = vmatprep.subr.mxu0 0.0
    %225 = vmatpush2.msra.mxu0 0.0
    %226 = vmatprep.subr.mxu0 0.0
    %227 = vmatpush2.msra.mxu0 0.0
    %228 = vmatprep.subr.mxu0 0.0
    %229 = vmatpush2.msra.mxu0 0.0
    %230 = vmatprep.subr.mxu0 0.0
    %231 = vmatpush2.msra.mxu0 0.0
    %232 = vmatprep.subr.mxu0 0.0
    %233 = vmatpush2.msra.mxu0 0.0
    %234 = vmatprep.subr.mxu0 0.0
    %235 = vmatpush2.msra.mxu0 0.0
    %236 = vmatprep.subr.mxu0 0.0
    %237 = vmatpush2.msra.mxu0 0.0
    %238 = vmatprep.subr.mxu0 0.0
    %239 = vmatpush2.msra.mxu0 0.0
    %240 = vmatprep.subr.mxu0 0.0
    %241 = vmatpush2.msra.mxu0 0.0
    %242 = vmatprep.mubr.f32.mxu0 0.0
    %243 = vmatmul.mubr.f32.gmra.mxu0 %v176
    %v244 = vpop.f32.mrf.mxu0
    %v245 = vadd.f32 %v171, %v244
    %v246 = vpop.f32.mrf.mxu0
    %247 = vdwg.mxu0
    %v248 = vld [vmem:[%s4] sm:$0x1]
    %v250 = vlaneseq
    %v251 = vshrl.u32 %v250, 7
    %v252 = vsub.s32 0, %v251
    %v253 = vrot.slane %v248, %v252
    %v255 = vadd.f32 %v245, %v253
    %v256 = vmax.f32 %v255, 0.0
    %v257 = vld [vmem:[#allocation10] sm:$0xff]
    %v258 = vld [vmem:[#allocation10 + $0x8] sm:$0xff]
    %v259 = vld [vmem:[#allocation10 + $0x10] sm:$0xff]
    %v260 = vld [vmem:[#allocation10 + $0x18] sm:$0xff]
    %v261 = vld [vmem:[#allocation10 + $0x20] sm:$0xff]
    %v262 = vld [vmem:[#allocation10 + $0x28] sm:$0xff]
    %v263 = vld [vmem:[#allocation10 + $0x30] sm:$0xff]
    %v264 = vld [vmem:[#allocation10 + $0x38] sm:$0xff]
    %v265 = vld [vmem:[#allocation10 + $0x40] sm:$0xff]
    %v266 = vld [vmem:[#allocation10 + $0x48] sm:$0xff]
    %v267 = vld [vmem:[#allocation10 + $0x50] sm:$0xff]
    %v268 = vld [vmem:[#allocation10 + $0x58] sm:$0xff]
    %v269 = vld [vmem:[#allocation10 + $0x60] sm:$0xff]
    %v270 = vld [vmem:[#allocation10 + $0x68] sm:$0xff]
    %v271 = vld [vmem:[#allocation10 + $0x70] sm:$0xff]
    %v272 = vld [vmem:[#allocation10 + $0x78] sm:$0xff]
    %v273 = vld [vmem:[%s6] sm:$0x1]
    %v275 = vlaneseq
    %v276 = vshrl.u32 %v275, 7
    %v277 = vsub.s32 0, %v276
    %v278 = vrot.slane %v273, %v277
    %280 = vmatprep.subr.mxu0 0.0
    %281 = vmatpush1.msra.mxu0 %v272
    %282 = vmatprep.subr.mxu0 0.0
    %283 = vmatpush1.msra.mxu0 %v271
    %284 = vmatprep.subr.mxu0 0.0
    %285 = vmatpush1.msra.mxu0 %v270
    %286 = vmatprep.subr.mxu0 0.0
    %287 = vmatpush1.msra.mxu0 %v269
    %288 = vmatprep.subr.mxu0 0.0
    %289 = vmatpush1.msra.mxu0 %v268
    %290 = vmatprep.subr.mxu0 0.0
    %291 = vmatpush1.msra.mxu0 %v267
    %292 = vmatprep.subr.mxu0 0.0
    %293 = vmatpush1.msra.mxu0 %v266
    %294 = vmatprep.subr.mxu0 0.0
    %295 = vmatpush1.msra.mxu0 %v265
    %296 = vmatprep.subr.mxu0 0.0
    %297 = vmatpush1.msra.mxu0 %v264
    %298 = vmatprep.subr.mxu0 0.0
    %299 = vmatpush1.msra.mxu0 %v263
    %300 = vmatprep.subr.mxu0 0.0
    %301 = vmatpush1.msra.mxu0 %v262
    %302 = vmatprep.subr.mxu0 0.0
    %303 = vmatpush1.msra.mxu0 %v261
    %304 = vmatprep.subr.mxu0 0.0
    %305 = vmatpush1.msra.mxu0 %v260
    %306 = vmatprep.subr.mxu0 0.0
    %307 = vmatpush1.msra.mxu0 %v259
    %308 = vmatprep.subr.mxu0 0.0
    %309 = vmatpush1.msra.mxu0 %v258
    %310 = vmatprep.subr.mxu0 0.0
    %311 = vmatpush1.msra.mxu0 %v257
    %312 = vmatprep.subr.mxu0 0.0
    %313 = vmatpush2.msra.mxu0 0.0
    %314 = vmatprep.subr.mxu0 0.0
    %315 = vmatpush2.msra.mxu0 0.0
    %316 = vmatprep.subr.mxu0 0.0
    %317 = vmatpush2.msra.mxu0 0.0
    %318 = vmatprep.subr.mxu0 0.0
    %319 = vmatpush2.msra.mxu0 0.0
    %320 = vmatprep.subr.mxu0 0.0
    %321 = vmatpush2.msra.mxu0 0.0
    %322 = vmatprep.subr.mxu0 0.0
    %323 = vmatpush2.msra.mxu0 0.0
    %324 = vmatprep.subr.mxu0 0.0
    %325 = vmatpush2.msra.mxu0 0.0
    %326 = vmatprep.subr.mxu0 0.0
    %327 = vmatpush2.msra.mxu0 0.0
    %328 = vmatprep.subr.mxu0 0.0
    %329 = vmatpush2.msra.mxu0 0.0
    %330 = vmatprep.subr.mxu0 0.0
    %331 = vmatpush2.msra.mxu0 0.0
    %332 = vmatprep.subr.mxu0 0.0
    %333 = vmatpush2.msra.mxu0 0.0
    %334 = vmatprep.subr.mxu0 0.0
    %335 = vmatpush2.msra.mxu0 0.0
    %336 = vmatprep.subr.mxu0 0.0
    %337 = vmatpush2.msra.mxu0 0.0
    %338 = vmatprep.subr.mxu0 0.0
    %339 = vmatpush2.msra.mxu0 0.0
    %340 = vmatprep.subr.mxu0 0.0
    %341 = vmatpush2.msra.mxu0 0.0
    %342 = vmatprep.subr.mxu0 0.0
    %343 = vmatpush2.msra.mxu0 0.0
    %344 = vmatprep.mubr.f32.mxu0 0.0
    %345 = vmatmul.mubr.f32.gmra.mxu0 %v256
    %v346 = vpop.f32.mrf.mxu0
    %v347 = vadd.f32 %v278, %v346
    %v348 = vpop.f32.mrf.mxu0
    %349 = vdwg.mxu0
    %v350 = vmax.f32 %v347, 0.0
    %v351 = vld [vmem:[%s7] sm:$0x1]
    %v353 = vlaneseq
    %v354 = vshrl.u32 %v353, 7
    %v355 = vsub.s32 0, %v354
    %v356 = vrot.slane %v351, %v355
    %v358 = vmul.f32 %v350, %v356
    %359 = vadd.xlane.f32.xlu0 %v358
    %v360 = vpop.xlane.xlu0 %359
    %s361 = sld [smem:[#allocation2]]
    %v362 = vstv %s361
    %v363 = vadd.f32 %v360, %v362
    %vm364 = vcmask 7168
    %365 = vst.msk [vmem:[%s9] sm:$0xff] %vm364, %v363
    // Predicated region
    $region58: #{tpu_custom_call.1} parent=1 // pred_check
      _
    $region59: #{tpu_custom_call.1} parent=1 // pred_check_branch
      %367 = sbr.rel (0) target = $region61
    $region60: #{tpu_custom_call.1} parent=1 // pred_region
      _
    $region61: #{tpu_custom_call.1} parent=1 // pred_fallthru
      _
    // Predicated region
    $region62: #{tpu_custom_call.1} parent=1 // pred_check
      _
    $region63: #{tpu_custom_call.1} parent=1 // pred_check_branch
      %369 = sbr.rel (0) target = $region65
    $region64: #{tpu_custom_call.1} parent=1 // pred_region
      _
    $region65: #{tpu_custom_call.1} parent=1 // pred_fallthru
      _
    %370 = vsyncpa [#allocation4], 1
    %371 = vsyncpa [#allocation6], 1
    %372 = vsyncpa [#allocation9], 1

</llo_original>
